<compile_context>
chip_gen: v5e
topology: v5e:2x2
jax: 0.10.0
libtpu: 0.0.40
codegen_flags: <defaults>
</compile_context>

<pallas_src>
import math
import functools

import jax
import jax.numpy as jnp
from jax import lax
from jax.experimental import pallas as pl
from jax.experimental.pallas import tpu as pltpu


_INV_SQRT2 = 1.0 / math.sqrt(2.0)

# Conservative budgets (bytes), valid for v5e/v6e/v7x.  v7x has 64 MiB VMEM
# per TensorCore (32 MiB scoped default) -> keep the fused footprint <= 20 MiB
# and request a 32 MiB scoped limit.
_FUSED_VMEM_BUDGET = 20 * 1024 * 1024
_VMEM_LIMIT_BYTES = 32 * 1024 * 1024


def _gelu_exact(x):
    # Exact (erf-based) GELU, matching torch.nn.GELU() default.
    return 0.5 * x * (1.0 + lax.erf(x * _INV_SQRT2))


def _round_up(x, m):
    return ((x + m - 1) // m) * m


def _pad2(a, rows, cols):
    r, c = a.shape
    if r == rows and c == cols:
        return a
    return jnp.pad(a, ((0, rows - r), (0, cols - c)))


def _pick_tile(dim, cap, quantum):
    """Largest multiple-of-`quantum` tile <= cap that evenly divides
    round_up(dim, quantum); avoids extra wrapper-side padding."""
    dim_pad = _round_up(dim, quantum)
    t = min(cap, dim_pad)
    t = (t // quantum) * quantum
    while dim_pad % t != 0:
        t -= quantum
    return t, dim_pad


def _split_rows(m, cap):
    """Row tile: near-equal multiple-of-8 blocks of at most `cap` rows,
    preferring >=2 blocks so v7x's 2nd TensorCore gets work."""
    n_blocks = max(1, -(-m // cap))
    if n_blocks == 1 and m > 8:
        n_blocks = 2
    return _round_up(-(-m // n_blocks), 8)


# --------------------------------------------------------------------------
# Fused fc1 + GELU + fc2 kernel (weights resident in VMEM, grid over M only).
# --------------------------------------------------------------------------
def _fused_mlp_kernel(x_ref, w1_ref, b1_ref, w2_ref, b2_ref, pre_ref, out_ref):
    y1 = jnp.dot(x_ref[...], w1_ref[...], preferred_element_type=jnp.float32)
    y1 = y1 + b1_ref[...].astype(jnp.float32)
    pre_ref[...] = y1.astype(pre_ref.dtype)

    g = _gelu_exact(y1)
    y2 = jnp.dot(g.astype(w2_ref.dtype), w2_ref[...],
                 preferred_element_type=jnp.float32)
    out_ref[...] = (y2 + b2_ref[...].astype(jnp.float32)).astype(out_ref.dtype)


def _fused_tm(M, K_pad, H_pad, O_pad, itemsize):
    """Row tile for the fused kernel, or None if the weight-resident footprint
    cannot fit the conservative VMEM budget."""
    tm = _split_rows(M, 512)
    weights = K_pad * H_pad + H_pad * O_pad + H_pad + O_pad
    while tm >= 8:
        tiles = tm * (K_pad + H_pad + O_pad)      # x, pre_act, main blocks
        live = tm * (H_pad + O_pad)               # f32 intermediates
        footprint = itemsize * (2 * weights + 2 * tiles) + 4 * live
        if footprint <= _FUSED_VMEM_BUDGET:
            return tm
        tm = _round_up(tm // 2, 8) if tm > 8 else 0
    return None


def _fused_mlp_call(x2d, w1_t, b1, w2_t, b2, tm, K_pad, H_pad, O_pad):
    M, K = x2d.shape
    H = w1_t.shape[1]
    O = w2_t.shape[1]
    M_pad = _round_up(M, tm)

    x_p = _pad2(x2d, M_pad, K_pad)
    w1_p = _pad2(w1_t, K_pad, H_pad)
    b1_p = _pad2(b1.reshape(1, -1), 1, H_pad)
    w2_p = _pad2(w2_t, H_pad, O_pad)
    b2_p = _pad2(b2.reshape(1, -1), 1, O_pad)

    cost = pl.CostEstimate(
        flops=2 * M * (K * H + H * O),
        transcendentals=M * H,
        bytes_accessed=x2d.dtype.itemsize * (M * K + K * H + H * O + M * H + M * O),
    )

    return pl.pallas_call(
        _fused_mlp_kernel,
        out_shape=(
            jax.ShapeDtypeStruct((M_pad, H_pad), x2d.dtype),
            jax.ShapeDtypeStruct((M_pad, O_pad), x2d.dtype),
        ),
        grid_spec=pltpu.PrefetchScalarGridSpec(
            num_scalar_prefetch=0,
            grid=(M_pad // tm,),
            in_specs=[
                pl.BlockSpec((tm, K_pad), lambda i: (i, 0)),      # x row tile
                pl.BlockSpec((K_pad, H_pad), lambda i: (0, 0)),   # w1 (resident)
                pl.BlockSpec((1, H_pad), lambda i: (0, 0)),       # b1
                pl.BlockSpec((H_pad, O_pad), lambda i: (0, 0)),   # w2 (resident)
                pl.BlockSpec((1, O_pad), lambda i: (0, 0)),       # b2
            ],
            out_specs=(
                pl.BlockSpec((tm, H_pad), lambda i: (i, 0)),      # pre_act
                pl.BlockSpec((tm, O_pad), lambda i: (i, 0)),      # main
            ),
        ),
        compiler_params=pltpu.CompilerParams(
            dimension_semantics=("parallel",),
            vmem_limit_bytes=_VMEM_LIMIT_BYTES,
        ),
        cost_estimate=cost,
    )(x_p, w1_p, b1_p, w2_p, b2_p)


# --------------------------------------------------------------------------
# Fallback: two tiled matmul calls (for weights too big to keep VMEM-resident).
# --------------------------------------------------------------------------
def _fc1_fallback_kernel(x_ref, w_ref, b_ref, y_ref, g_ref):
    # Grid (i, j, k); k innermost. y_ref (f32) is resident across k -> use it
    # directly as the accumulator; bias folded into the k==0 init.
    @pl.when(pl.program_id(2) == 0)
    def _init():
        y_ref[...] = jnp.broadcast_to(b_ref[...].astype(jnp.float32), y_ref.shape)

    y_ref[...] += jnp.dot(x_ref[...], w_ref[...], preferred_element_type=jnp.float32)

    @pl.when(pl.program_id(2) == pl.num_programs(2) - 1)
    def _finalize():
        # GELU computed exactly once per output element (not once per N-tile
        # of the next layer).
        g_ref[...] = _gelu_exact(y_ref[...])


def _fc2_fallback_kernel(x_ref, w_ref, b_ref, o_ref):
    @pl.when(pl.program_id(2) == 0)
    def _init():
        o_ref[...] = jnp.broadcast_to(b_ref[...].astype(jnp.float32), o_ref.shape)

    o_ref[...] += jnp.dot(x_ref[...], w_ref[...], preferred_element_type=jnp.float32)


def _linear_fallback(x2d, w_t, b, *, with_gelu_out):
    """Tiled y = x @ w_t + b (optionally also emitting gelu(y)).

    x2d may carry zero padding beyond w_t's logical K (the padded weight rows
    are zero, so they contribute nothing). Returns padded f32 arrays; caller
    slices back to logical shapes.
    """
    M, K_in = x2d.shape
    K_w, N = w_t.shape
    K = max(K_in, K_w)

    tk, K_pad = _pick_tile(K, 512, 128)
    tn, N_pad = _pick_tile(N, 512, 128)
    tm = _split_rows(M, 1024)
    M_pad = _round_up(M, tm)

    x_p = _pad2(x2d, M_pad, K_pad)
    w_p = _pad2(w_t, K_pad, N_pad)
    b_p = _pad2(b.reshape(1, -1), 1, N_pad)

    grid = (M_pad // tm, N_pad // tn, K_pad // tk)

    in_specs = [
        pl.BlockSpec((tm, tk), lambda i, j, k: (i, k)),   # x tile
        pl.BlockSpec((tk, tn), lambda i, j, k: (k, j)),   # weight tile
        pl.BlockSpec((1, tn), lambda i, j, k: (0, j)),    # bias tile
    ]
    params = pltpu.CompilerParams(
        dimension_semantics=("parallel", "parallel", "arbitrary"),
        vmem_limit_bytes=_VMEM_LIMIT_BYTES,
    )
    cost = pl.CostEstimate(
        flops=2 * M * K * N,
        transcendentals=(M * N) if with_gelu_out else 0,
        bytes_accessed=4 * (M * K * (N_pad // tn) + K * N * (M_pad // tm) + M * N),
    )

    if with_gelu_out:
        return pl.pallas_call(
            _fc1_fallback_kernel,
            out_shape=(
                jax.ShapeDtypeStruct((M_pad, N_pad), jnp.float32),
                jax.ShapeDtypeStruct((M_pad, N_pad), jnp.float32),
            ),
            grid_spec=pltpu.PrefetchScalarGridSpec(
                num_scalar_prefetch=0,
                grid=grid,
                in_specs=in_specs,
                out_specs=(
                    pl.BlockSpec((tm, tn), lambda i, j, k: (i, j)),
                    pl.BlockSpec((tm, tn), lambda i, j, k: (i, j)),
                ),
            ),
            compiler_params=params,
            cost_estimate=cost,
        )(x_p, w_p, b_p)

    return pl.pallas_call(
        _fc2_fallback_kernel,
        out_shape=jax.ShapeDtypeStruct((M_pad, N_pad), jnp.float32),
        grid_spec=pltpu.PrefetchScalarGridSpec(
            num_scalar_prefetch=0,
            grid=grid,
            in_specs=in_specs,
            out_specs=pl.BlockSpec((tm, tn), lambda i, j, k: (i, j)),
        ),
        compiler_params=params,
        cost_estimate=cost,
    )(x_p, w_p, b_p)


# --------------------------------------------------------------------------
# Forward
# --------------------------------------------------------------------------
@functools.partial(jax.jit, static_argnames=("force_fallback",))
def mlp_forward(x, w1_t, b1, w2_t, b2, force_fallback=False):
    """Pallas implementation of MLP.forward.

    x:    (..., T, in_features)
    w1_t: (in_features, hidden)  -- fc1 weight, PRE-TRANSPOSED outside jit
    b1:   (hidden,)
    w2_t: (hidden, out)          -- fc2 weight, PRE-TRANSPOSED outside jit
    b2:   (out,)
    Returns (main, pre_act) matching PyTorch's (x, x_out):
      main    = fc2(GELU(fc1(x))).flatten(-2, -1)  -> (..., T*out)
      pre_act = fc1(x).flatten(-2, -1)             -> (..., T*hidden)
    """
    lead = x.shape[:-2]
    T, K = x.shape[-2], x.shape[-1]
    H = w1_t.shape[1]
    O = w2_t.shape[1]
    M = T
    for d in lead:
        M *= d

    x2d = x.reshape(M, K)

    # Lane-dense padded feature dims (128-multiples).
    K_pad = _round_up(K, 128)
    H_pad = _round_up(H, 128)
    O_pad = _round_up(O, 128)

    tm = None if force_fallback else _fused_tm(M, K_pad, H_pad, O_pad, x.dtype.itemsize)

    if tm is not None:
        # Single fused kernel: no HBM round-trip for y1, GELU computed once.
        y1_p, y2_p = _fused_mlp_call(x2d, w1_t, b1, w2_t, b2, tm, K_pad, H_pad, O_pad)
    else:
        # Two-call fallback for very large hidden sizes.
        y1_p, g_p = _linear_fallback(x2d, w1_t, b1, with_gelu_out=True)
        y2_p = _linear_fallback(g_p, w2_t, b2, with_gelu_out=False)

    # TODO(synk): Dropout with p > 0 not implemented (module default p=0.0 => identity).
    pre_act = y1_p[:M, :H].astype(x.dtype).reshape(*lead, T * H)
    main = y2_p[:M, :O].astype(x.dtype).reshape(*lead, T * O)
    return main, pre_act


def init_linear(key, fan_in, fan_out, dtype=jnp.float32):
    """nn.Linear default init: uniform(+/- 1/sqrt(fan_in)) for weight and bias."""
    kw, kb = jax.random.split(key)
    bound = 1.0 / math.sqrt(fan_in)
    w = jax.random.uniform(kw, (fan_out, fan_in), dtype, -bound, bound)
    b = jax.random.uniform(kb, (fan_out,), dtype, -bound, bound)
    return w, b


if __name__ == "__main__":
    key = jax.random.PRNGKey(0)
    k_x, k_1, k_2 = jax.random.split(key, 3)

    # Small shapes consistent with the forward: (batch, tokens, in_features).
    B, T = 2, 8
    in_features, hidden_features, out_features = 32, 64, 32

    x = jax.random.normal(k_x, (B, T, in_features), dtype=jnp.float32)
    w1, b1 = init_linear(k_1, in_features, hidden_features)   # torch layout (H, K)
    w2, b2 = init_linear(k_2, hidden_features, out_features)  # torch layout (O, H)

    # Pre-transpose ONCE outside the jitted forward (no per-call HBM transpose).
    w1_t = jnp.asarray(w1.T)   # (in_features, hidden)
    w2_t = jnp.asarray(w2.T)   # (hidden, out)

    # Primary (fused) path.
    main, pre_act = mlp_forward(x, w1_t, b1, w2_t, b2)
    jax.block_until_ready((main, pre_act))

    # Pure-JAX reference (exact erf GELU; dropout p=0 is identity).
    y1_ref = x @ w1.T + b1
    y2_ref = _gelu_exact(y1_ref) @ w2.T + b2
    ref_main = y2_ref.reshape(B, T * out_features)
    ref_pre = y1_ref.reshape(B, T * hidden_features)

    assert main.shape == (B, T * out_features)
    assert pre_act.shape == (B, T * hidden_features)
    assert jnp.allclose(main, ref_main, atol=1e-5, rtol=1e-5)
    assert jnp.allclose(pre_act, ref_pre, atol=1e-5, rtol=1e-5)

    # Also exercise the two-call fallback path (used when the weights do not
    # fit the fused kernel's VMEM budget).
    main_fb, pre_fb = mlp_forward(x, w1_t, b1, w2_t, b2, force_fallback=True)
    jax.block_until_ready((main_fb, pre_fb))
    assert jnp.allclose(main_fb, ref_main, atol=1e-5, rtol=1e-5)
    assert jnp.allclose(pre_fb, ref_pre, atol=1e-5, rtol=1e-5)

    print("KERNEL_OK")
</pallas_src>

<mosaic_0001>
module attributes {stable_mosaic.version = 11 : i64} {
  func.func @_fused_mlp_kernel(%arg0: i32, %arg1: memref<8x128xf32, #tpu.memory_space<vmem>>, %arg2: memref<128x128xf32, #tpu.memory_space<vmem>>, %arg3: memref<1x128xf32, #tpu.memory_space<vmem>>, %arg4: memref<128x128xf32, #tpu.memory_space<vmem>>, %arg5: memref<1x128xf32, #tpu.memory_space<vmem>>, %arg6: memref<8x128xf32, #tpu.memory_space<vmem>>, %arg7: memref<8x128xf32, #tpu.memory_space<vmem>>) attributes {dimension_semantics = [#tpu.dimension_semantics<parallel>], iteration_bounds = array<i64: 2>, scalar_prefetch = 0 : i64, scratch_operands = 0 : i64, tpu.core_type = #tpu.core_type<tc>, window_params = [{transform_indices = @transform_0, window_bounds = array<i64: 8, 128>}, {pipeline_mode = #tpu.pipeline_mode<synchronous>, transform_indices = @transform_1, window_bounds = array<i64: 128, 128>}, {pipeline_mode = #tpu.pipeline_mode<synchronous>, transform_indices = @transform_2, window_bounds = array<i64: 1, 128>}, {pipeline_mode = #tpu.pipeline_mode<synchronous>, transform_indices = @transform_3, window_bounds = array<i64: 128, 128>}, {pipeline_mode = #tpu.pipeline_mode<synchronous>, transform_indices = @transform_4, window_bounds = array<i64: 1, 128>}, {transform_indices = @transform_5, window_bounds = array<i64: 8, 128>}, {transform_indices = @transform_6, window_bounds = array<i64: 8, 128>}]} {
    %c0 = arith.constant 0 : index
    %c0_0 = arith.constant 0 : index
    %0 = vector.load %arg1[%c0, %c0_0] : memref<8x128xf32, #tpu.memory_space<vmem>>, vector<8x128xf32>
    %c0_1 = arith.constant 0 : index
    %c0_2 = arith.constant 0 : index
    %1 = vector.load %arg2[%c0_1, %c0_2] : memref<128x128xf32, #tpu.memory_space<vmem>>, vector<128x128xf32>
    %cst = arith.constant dense<0.000000e+00> : vector<8x128xf32>
    %2 = tpu.matmul %0, %1, %cst {dimension_numbers = #tpu.dot_dimension_numbers<[1], [0], [0], [1], [0, 0, 1, 1], [], []>} : vector<8x128xf32>, vector<128x128xf32>, vector<8x128xf32> -> vector<8x128xf32>
    %c0_3 = arith.constant 0 : index
    %c0_4 = arith.constant 0 : index
    %3 = vector.load %arg3[%c0_3, %c0_4] : memref<1x128xf32, #tpu.memory_space<vmem>>, vector<1x128xf32>
    %4 = vector.broadcast %3 : vector<1x128xf32> to vector<8x128xf32>
    %5 = arith.addf %2, %4 : vector<8x128xf32>
    %c0_5 = arith.constant 0 : index
    %c0_6 = arith.constant 0 : index
    %6 = vector.load %arg6[%c0_5, %c0_6] : memref<8x128xf32, #tpu.memory_space<vmem>>, vector<8x128xf32>
    tpu.vector_store %arg6[%c0_5, %c0_6], %5 {strides = array<i32>} : memref<8x128xf32, #tpu.memory_space<vmem>>, vector<8x128xf32>,
    %cst_7 = arith.constant 5.000000e-01 : f32
    %7 = vector.broadcast %cst_7 : f32 to vector<8x128xf32>
    %8 = arith.mulf %7, %5 : vector<8x128xf32>
    %cst_8 = arith.constant 0.707106769 : f32
    %9 = vector.broadcast %cst_8 : f32 to vector<8x128xf32>
    %10 = arith.mulf %5, %9 : vector<8x128xf32>
    %11 = math.erf %10 : vector<8x128xf32>
    %cst_9 = arith.constant 1.000000e+00 : f32
    %12 = vector.broadcast %cst_9 : f32 to vector<8x128xf32>
    %13 = arith.addf %12, %11 : vector<8x128xf32>
    %14 = arith.mulf %8, %13 : vector<8x128xf32>
    %c0_10 = arith.constant 0 : index
    %c0_11 = arith.constant 0 : index
    %15 = vector.load %arg4[%c0_10, %c0_11] : memref<128x128xf32, #tpu.memory_space<vmem>>, vector<128x128xf32>
    %cst_12 = arith.constant dense<0.000000e+00> : vector<8x128xf32>
    %16 = tpu.matmul %14, %15, %cst_12 {dimension_numbers = #tpu.dot_dimension_numbers<[1], [0], [0], [1], [0, 0, 1, 1], [], []>} : vector<8x128xf32>, vector<128x128xf32>, vector<8x128xf32> -> vector<8x128xf32>
    %c0_13 = arith.constant 0 : index
    %c0_14 = arith.constant 0 : index
    %17 = vector.load %arg5[%c0_13, %c0_14] : memref<1x128xf32, #tpu.memory_space<vmem>>, vector<1x128xf32>
    %18 = vector.broadcast %17 : vector<1x128xf32> to vector<8x128xf32>
    %19 = arith.addf %16, %18 : vector<8x128xf32>
    %c0_15 = arith.constant 0 : index
    %c0_16 = arith.constant 0 : index
    %20 = vector.load %arg7[%c0_15, %c0_16] : memref<8x128xf32, #tpu.memory_space<vmem>>, vector<8x128xf32>
    tpu.vector_store %arg7[%c0_15, %c0_16], %19 {strides = array<i32>} : memref<8x128xf32, #tpu.memory_space<vmem>>, vector<8x128xf32>,
    return
  }
  func.func @transform_0(%arg0: i32) -> (i32, i32) {
    %c0_i32 = arith.constant 0 : i32
    %c0_i32_0 = arith.constant 0 : i32
    return %arg0, %c0_i32 : i32, i32
  }
  func.func @transform_1(%arg0: i32) -> (i32, i32) {
    %c0_i32 = arith.constant 0 : i32
    %c0_i32_0 = arith.constant 0 : i32
    %c0_i32_1 = arith.constant 0 : i32
    return %c0_i32, %c0_i32_0 : i32, i32
  }
  func.func @transform_2(%arg0: i32) -> (i32, i32) {
    %c0_i32 = arith.constant 0 : i32
    %c0_i32_0 = arith.constant 0 : i32
    %c0_i32_1 = arith.constant 0 : i32
    return %c0_i32, %c0_i32_0 : i32, i32
  }
  func.func @transform_3(%arg0: i32) -> (i32, i32) {
    %c0_i32 = arith.constant 0 : i32
    %c0_i32_0 = arith.constant 0 : i32
    %c0_i32_1 = arith.constant 0 : i32
    return %c0_i32, %c0_i32_0 : i32, i32
  }
  func.func @transform_4(%arg0: i32) -> (i32, i32) {
    %c0_i32 = arith.constant 0 : i32
    %c0_i32_0 = arith.constant 0 : i32
    %c0_i32_1 = arith.constant 0 : i32
    return %c0_i32, %c0_i32_0 : i32, i32
  }
  func.func @transform_5(%arg0: i32) -> (i32, i32) {
    %c0_i32 = arith.constant 0 : i32
    %c0_i32_0 = arith.constant 0 : i32
    return %arg0, %c0_i32 : i32, i32
  }
  func.func @transform_6(%arg0: i32) -> (i32, i32) {
    %c0_i32 = arith.constant 0 : i32
    %c0_i32_0 = arith.constant 0 : i32
    return %arg0, %c0_i32 : i32, i32
  }
}

</mosaic_0001>

<llo_original>
// kernel: mlp_forward.1
$region0: #{mlp_forward.1}
  #allocation0 [shape = 'u32[]', space=smem, size = 0x4, offset = 0x4, fixed_abs, tag = 'smem constant byte address 0x4 - core index']
  #allocation1 [shape = 'u32[72,128]{1,0:T(1,128)}', space=vmem, size = 0x9000, scoped, tag = 'internal scratch']
  %s0 = inlined_call_operand.vmem [shape: f32[16,128], index: 0, kind: input, shape index: {}]
  %s1 = inlined_call_operand.vmem [shape: f32[128,128], index: 1, kind: input, shape index: {}]
  %s2 = inlined_call_operand.vmem [shape: f32[1,128], index: 2, kind: input, shape index: {}]
  %s3 = inlined_call_operand.vmem [shape: f32[128,128], index: 3, kind: input, shape index: {}]
  %s4 = inlined_call_operand.vmem [shape: f32[1,128], index: 4, kind: input, shape index: {}]
  %s5 = inlined_call_operand.vmem [shape: f32[16,128], index: 5, kind: output, shape index: {0}]
  %s6 = inlined_call_operand.vmem [shape: f32[16,128], index: 6, kind: output, shape index: {1}]
  %7 = xla_tuple %s5, %s6
  %s8 = sld [smem:[#allocation0]]
  $region61: #{mlp_forward.1} parent=0
    _
  %s10 = ssub.s32 1, %s8
  %s11 = scalar_select 0, %s10, %s8
  loop: start=0, step=1, limit=4
  $region2: #{mlp_forward.1} parent=0 // loop_pre_header
    _
  $region3: #{mlp_forward.1} parent=0 // loop_header
    %s13 = sphi 0, %s17
    %p14 = scmp.ge.s32.totalorder %s13, 4
    %s23 = sphi 0, %s25
    %s26 = sphi 0, %s23
    %s27 = sphi 0, %s26
    %s43 = sphi 0, %s27
    %s47 = sphi 0, %s47
    %s49 = sphi 0, %s47
    %s50 = sphi 0, %s49
    %s64 = sphi 0, %s50
    %s68 = sphi 0, %s68
    %s70 = sphi 0, %s68
    %s71 = sphi 0, %s70
    %s85 = sphi 0, %s71
    %s89 = sphi 0, %s89
    %s91 = sphi 0, %s89
    %s92 = sphi 0, %s91
    %s106 = sphi 0, %s92
    %s110 = sphi 0, %s110
    %s112 = sphi 0, %s110
    %s113 = sphi 0, %s112
    %s127 = sphi 0, %s113
    %s133 = sphi 0, %s135
    %s136 = sphi 0, %s133
    %s137 = sphi 0, %s136
    %s153 = sphi 0, %s137
    %s159 = sphi 0, %s161
    %s162 = sphi 0, %s159
    %s163 = sphi 0, %s162
    %s179 = sphi 0, %s163
  $region4: #{mlp_forward.1} parent=0 // loop_header_branch
    %16 = sbr.rel (%p14) target = $region8
  $region5: #{mlp_forward.1} parent=0 // loop_body
    %s18 = ssub.s32 %s13, 1
    %s19 = ssub.s32 %s13, 2
    %s20 = sadd.s32 %s13, 1
    %s21 = ssub.s32 %s13, %s20
    %p22 = scmp.eq.s32.totalorder %s21, 0
    %s24 = sadd.s32 %s23, 1
    %s25 = scalar_select %p22, %s23, %s24
    %p28 = pneg %p22
    %p29 = scmp.eq.s32.totalorder %s13, 1
    %p30 = por %p28, %p29
    %p31 = scmp.ne.s32.totalorder %s23, %s26
    %p32 = scmp.eq.s32.totalorder %s13, 0
    %p33 = por %p31, %p32
    %p34 = scmp.ne.s32.totalorder %s23, %s26
    %p35 = scmp.eq.s32.totalorder %s18, 1
    %p36 = por %p34, %p35
    %p37 = scmp.ne.s32.totalorder %s26, %s27
    %p38 = scmp.eq.s32.totalorder %s18, 0
    %p39 = por %p37, %p38
    %p40 = scmp.ne.s32.totalorder %s26, %s27
    %p41 = scmp.eq.s32.totalorder %s19, 1
    %p42 = por %p40, %p41
    %p44 = scmp.ne.s32.totalorder %s27, %s43
    %p45 = scmp.eq.s32.totalorder %s19, 0
    %p46 = por %p44, %p45
    %s48 = sadd.s32 %s47, 1
    %p51 = scmp.eq.s32.totalorder %s13, 1
    %p52 = scmp.ne.s32.totalorder %s47, %s49
    %p53 = scmp.eq.s32.totalorder %s13, 0
    %p54 = por %p52, %p53
    %p55 = scmp.ne.s32.totalorder %s47, %s49
    %p56 = scmp.eq.s32.totalorder %s18, 1
    %p57 = por %p55, %p56
    %p58 = scmp.ne.s32.totalorder %s49, %s50
    %p59 = scmp.eq.s32.totalorder %s18, 0
    %p60 = por %p58, %p59
    %p61 = scmp.ne.s32.totalorder %s49, %s50
    %p62 = scmp.eq.s32.totalorder %s19, 1
    %p63 = por %p61, %p62
    %p65 = scmp.ne.s32.totalorder %s50, %s64
    %p66 = scmp.eq.s32.totalorder %s19, 0
    %p67 = por %p65, %p66
    %s69 = sadd.s32 %s68, 1
    %p72 = scmp.eq.s32.totalorder %s13, 1
    %p73 = scmp.ne.s32.totalorder %s68, %s70
    %p74 = scmp.eq.s32.totalorder %s13, 0
    %p75 = por %p73, %p74
    %p76 = scmp.ne.s32.totalorder %s68, %s70
    %p77 = scmp.eq.s32.totalorder %s18, 1
    %p78 = por %p76, %p77
    %p79 = scmp.ne.s32.totalorder %s70, %s71
    %p80 = scmp.eq.s32.totalorder %s18, 0
    %p81 = por %p79, %p80
    %p82 = scmp.ne.s32.totalorder %s70, %s71
    %p83 = scmp.eq.s32.totalorder %s19, 1
    %p84 = por %p82, %p83
    %p86 = scmp.ne.s32.totalorder %s71, %s85
    %p87 = scmp.eq.s32.totalorder %s19, 0
    %p88 = por %p86, %p87
    %s90 = sadd.s32 %s89, 1
    %p93 = scmp.eq.s32.totalorder %s13, 1
    %p94 = scmp.ne.s32.totalorder %s89, %s91
    %p95 = scmp.eq.s32.totalorder %s13, 0
    %p96 = por %p94, %p95
    %p97 = scmp.ne.s32.totalorder %s89, %s91
    %p98 = scmp.eq.s32.totalorder %s18, 1
    %p99 = por %p97, %p98
    %p100 = scmp.ne.s32.totalorder %s91, %s92
    %p101 = scmp.eq.s32.totalorder %s18, 0
    %p102 = por %p100, %p101
    %p103 = scmp.ne.s32.totalorder %s91, %s92
    %p104 = scmp.eq.s32.totalorder %s19, 1
    %p105 = por %p103, %p104
    %p107 = scmp.ne.s32.totalorder %s92, %s106
    %p108 = scmp.eq.s32.totalorder %s19, 0
    %p109 = por %p107, %p108
    %s111 = sadd.s32 %s110, 1
    %p114 = scmp.eq.s32.totalorder %s13, 1
    %p115 = scmp.ne.s32.totalorder %s110, %s112
    %p116 = scmp.eq.s32.totalorder %s13, 0
    %p117 = por %p115, %p116
    %p118 = scmp.ne.s32.totalorder %s110, %s112
    %p119 = scmp.eq.s32.totalorder %s18, 1
    %p120 = por %p118, %p119
    %p121 = scmp.ne.s32.totalorder %s112, %s113
    %p122 = scmp.eq.s32.totalorder %s18, 0
    %p123 = por %p121, %p122
    %p124 = scmp.ne.s32.totalorder %s112, %s113
    %p125 = scmp.eq.s32.totalorder %s19, 1
    %p126 = por %p124, %p125
    %p128 = scmp.ne.s32.totalorder %s113, %s127
    %p129 = scmp.eq.s32.totalorder %s19, 0
    %p130 = por %p128, %p129
    %s131 = ssub.s32 %s13, %s20
    %p132 = scmp.eq.s32.totalorder %s131, 0
    %s134 = sadd.s32 %s133, 1
    %s135 = scalar_select %p132, %s133, %s134
    %p138 = pneg %p132
    %p139 = scmp.eq.s32.totalorder %s13, 1
    %p140 = por %p138, %p139
    %p141 = scmp.ne.s32.totalorder %s133, %s136
    %p142 = scmp.eq.s32.totalorder %s13, 0
    %p143 = por %p141, %p142
    %p144 = scmp.ne.s32.totalorder %s133, %s136
    %p145 = scmp.eq.s32.totalorder %s18, 1
    %p146 = por %p144, %p145
    %p147 = scmp.ne.s32.totalorder %s136, %s137
    %p148 = scmp.eq.s32.totalorder %s18, 0
    %p149 = por %p147, %p148
    %p150 = scmp.ne.s32.totalorder %s136, %s137
    %p151 = scmp.eq.s32.totalorder %s19, 1
    %p152 = por %p150, %p151
    %p154 = scmp.ne.s32.totalorder %s137, %s153
    %p155 = scmp.eq.s32.totalorder %s19, 0
    %p156 = por %p154, %p155
    %s157 = ssub.s32 %s13, %s20
    %p158 = scmp.eq.s32.totalorder %s157, 0
    %s160 = sadd.s32 %s159, 1
    %s161 = scalar_select %p158, %s159, %s160
    %p164 = pneg %p158
    %p165 = scmp.eq.s32.totalorder %s13, 1
    %p166 = por %p164, %p165
    %p167 = scmp.ne.s32.totalorder %s159, %s162
    %p168 = scmp.eq.s32.totalorder %s13, 0
    %p169 = por %p167, %p168
    %p170 = scmp.ne.s32.totalorder %s159, %s162
    %p171 = scmp.eq.s32.totalorder %s18, 1
    %p172 = por %p170, %p171
    %p173 = scmp.ne.s32.totalorder %s162, %s163
    %p174 = scmp.eq.s32.totalorder %s18, 0
    %p175 = por %p173, %p174
    %p176 = scmp.ne.s32.totalorder %s162, %s163
    %p177 = scmp.eq.s32.totalorder %s19, 1
    %p178 = por %p176, %p177
    %p180 = scmp.ne.s32.totalorder %s163, %s179
    %p181 = scmp.eq.s32.totalorder %s19, 0
    %p182 = por %p180, %p181
    %p183 = scmp.le.s32.totalorder 1, %s13
    %p184 = scmp.lt.s32.totalorder %s13, 3
    %p185 = pnand %p183, %p184
    %p186 = pneg %p185
    // Predicated region
    $region9: #{mlp_forward.1} parent=5 // pred_check
      _
    $region10: #{mlp_forward.1} parent=5 // pred_check_branch
      %188 = sbr.rel (%p185) target = $region12
    $region11: #{mlp_forward.1} parent=5 // pred_region
      %s189 = ssub.s32 %s13, 1
      // Predicated region
      $region13: #{mlp_forward.1} parent=11 // pred_check
        %p190 = pneg %p60
      $region14: #{mlp_forward.1} parent=11 // pred_check_branch
        %192 = sbr.rel (%p190) target = $region16
      $region15: #{mlp_forward.1} parent=11 // pred_region
        _
      $region16: #{mlp_forward.1} parent=11 // pred_fallthru
        _
      // Predicated region
      $region17: #{mlp_forward.1} parent=11 // pred_check
        %p193 = pneg %p81
      $region18: #{mlp_forward.1} parent=11 // pred_check_branch
        %195 = sbr.rel (%p193) target = $region20
      $region19: #{mlp_forward.1} parent=11 // pred_region
        _
      $region20: #{mlp_forward.1} parent=11 // pred_fallthru
        _
      // Predicated region
      $region21: #{mlp_forward.1} parent=11 // pred_check
        %p196 = pneg %p102
      $region22: #{mlp_forward.1} parent=11 // pred_check_branch
        %198 = sbr.rel (%p196) target = $region24
      $region23: #{mlp_forward.1} parent=11 // pred_region
        _
      $region24: #{mlp_forward.1} parent=11 // pred_fallthru
        _
      // Predicated region
      $region25: #{mlp_forward.1} parent=11 // pred_check
        %p199 = pneg %p123
      $region26: #{mlp_forward.1} parent=11 // pred_check_branch
        %201 = sbr.rel (%p199) target = $region28
      $region27: #{mlp_forward.1} parent=11 // pred_region
        _
      $region28: #{mlp_forward.1} parent=11 // pred_fallthru
        _
    $region12: #{mlp_forward.1} parent=5 // pred_fallthru
      _
    %p202 = scmp.lt.s32.totalorder %s13, 2
    // Predicated region
    $region29: #{mlp_forward.1} parent=5 // pred_check
      %p203 = pneg %p202
    $region30: #{mlp_forward.1} parent=5 // pred_check_branch
      %205 = sbr.rel (%p203) target = $region32
    $region31: #{mlp_forward.1} parent=5 // pred_region
      // Predicated region
      $region33: #{mlp_forward.1} parent=31 // pred_check
        %p206 = pneg %p33
      $region34: #{mlp_forward.1} parent=31 // pred_check_branch
        %208 = sbr.rel (%p206) target = $region36
      $region35: #{mlp_forward.1} parent=31 // pred_region
        %p209 = scmp.lt.s32.totalorder %s13, 1
        %s210 = scalar_select %p209, %s13, 1
        %s211 = smul.addr %s210, 8
        %s212 = scalar_lea.vmem %s0, %s211
      $region36: #{mlp_forward.1} parent=31 // pred_fallthru
        _
    $region32: #{mlp_forward.1} parent=5 // pred_fallthru
      _
    %p213 = scmp.le.s32.totalorder 1, %s13
    %p214 = scmp.lt.s32.totalorder %s13, 3
    %p215 = pnand %p213, %p214
    %p216 = pneg %p215
    // Predicated region
    $region37: #{mlp_forward.1} parent=5 // pred_check
      _
    $region38: #{mlp_forward.1} parent=5 // pred_check_branch
      %218 = sbr.rel (%p215) target = $region40
    $region39: #{mlp_forward.1} parent=5 // pred_region
      %s219 = ssub.s32 %s13, 1
      %p220 = scmp.lt.s32.totalorder %s18, 1
      %s221 = scalar_select %p220, %s18, 1
      %s222 = smul.addr %s221, 8
      %s223 = scalar_lea.vmem %s0, %s222
      %p224 = pneg %p39
      %p225 = pneg %p36
      %p226 = pneg %p60
      %p227 = pneg %p57
      %p228 = pneg %p81
      %p229 = pneg %p78
      %p230 = pneg %p102
      %p231 = pneg %p99
      %p232 = pneg %p123
      %p233 = pneg %p120
      %p234 = pneg %p149
      %p235 = pneg %p146
      %p236 = scmp.lt.s32.totalorder %s18, 1
      %s237 = scalar_select %p236, %s18, 1
      %s238 = smul.addr %s237, 8
      %s239 = scalar_lea.vmem %s5, %s238
      %p240 = pneg %p175
      %p241 = pneg %p172
      %p242 = scmp.lt.s32.totalorder %s18, 1
      %s243 = scalar_select %p242, %s18, 1
      %s244 = smul.addr %s243, 8
      %s245 = scalar_lea.vmem %s6, %s244
      %p246 = scmp.lt.s32.totalorder %s18, 1
      %s247 = scalar_select %p246, %s18, 1
      %s248 = smul.addr %s247, 8
      %s249 = scalar_lea.vmem %s0, %s248
      %p250 = scmp.lt.s32.totalorder %s18, 1
      %s251 = scalar_select %p250, %s18, 1
      %s252 = smul.addr %s251, 8
      %s253 = scalar_lea.vmem %s5, %s252
      %p254 = scmp.lt.s32.totalorder %s18, 1
      %s255 = scalar_select %p254, %s18, 1
      %s256 = smul.addr %s255, 8
      %s257 = scalar_lea.vmem %s6, %s256
      %v258 = vld [vmem:[%s249] sm:$0xff]
      %v259 = vld [vmem:[%s1] sm:$0xff]
      %v260 = vld [vmem:[%s1 + $0x8] sm:$0xff]
      %v261 = vld [vmem:[%s1 + $0x10] sm:$0xff]
      %v262 = vld [vmem:[%s1 + $0x18] sm:$0xff]
      %v263 = vld [vmem:[%s1 + $0x20] sm:$0xff]
      %v264 = vld [vmem:[%s1 + $0x28] sm:$0xff]
      %v265 = vld [vmem:[%s1 + $0x30] sm:$0xff]
      %v266 = vld [vmem:[%s1 + $0x38] sm:$0xff]
      %v267 = vld [vmem:[%s1 + $0x40] sm:$0xff]
      %v268 = vld [vmem:[%s1 + $0x48] sm:$0xff]
      %v269 = vld [vmem:[%s1 + $0x50] sm:$0xff]
      %v270 = vld [vmem:[%s1 + $0x58] sm:$0xff]
      %v271 = vld [vmem:[%s1 + $0x60] sm:$0xff]
      %v272 = vld [vmem:[%s1 + $0x68] sm:$0xff]
      %v273 = vld [vmem:[%s1 + $0x70] sm:$0xff]
      %v274 = vld [vmem:[%s1 + $0x78] sm:$0xff]
      %v275 = vld [vmem:[%s2] sm:$0x1]
      %v277 = vperm.slane %v275, 0
      %279 = vmatpush.msra.mxu0 %v274
      %280 = vmatpush.msra.mxu0 %v273
      %281 = vmatpush.msra.mxu0 %v272
      %282 = vmatpush.msra.mxu0 %v271
      %283 = vmatpush.msra.mxu0 %v270
      %284 = vmatpush.msra.mxu0 %v269
      %285 = vmatpush.msra.mxu0 %v268
      %286 = vmatpush.msra.mxu0 %v267
      %287 = vmatpush.msra.mxu0 %v266
      %288 = vmatpush.msra.mxu0 %v265
      %289 = vmatpush.msra.mxu0 %v264
      %290 = vmatpush.msra.mxu0 %v263
      %291 = vmatpush.msra.mxu0 %v262
      %292 = vmatpush.msra.mxu0 %v261
      %293 = vmatpush.msra.mxu0 %v260
      %294 = vmatpush.msra.mxu0 %v259
      %295 = vmatmul.f32.gmra.mxu0 %v258
      %v296 = vpop.f32.mrf.mxu0
      %v297 = vadd.f32 %v277, %v296
      %298 = vdwg.mxu0
      %299 = vst [vmem:[%s253] sm:$0xff] %v297
      %v300 = vmul.f32 %v297, 0.5
      %v301 = vmul.f32 %v297, 0.70710677
      %v302 = vmul.f32 %v301, %v301
      %v303 = vmin.f32 16.0, %v302
      %v304 = vmul.f32 %v303, 2.1237322e-06
      %v305 = vadd.f32 %v304, 0.00028619796
      %v306 = vmul.f32 %v303, %v305
      %v307 = vadd.f32 %v306, 0.0036580483
      %v308 = vmul.f32 %v303, %v307
      %v309 = vadd.f32 %v308, 0.05243302
      %v310 = vmul.f32 %v303, %v309
      %v311 = vadd.f32 %v310, 0.18741608
      %v312 = vmul.f32 %v303, %v311
      %v313 = vadd.f32 %v312, 1.1283791
      %v314 = vmul.f32 %v301, %v313
      %v315 = vmul.f32 %v303, 3.8918573e-05
      %v316 = vadd.f32 %v315, 0.001143296
      %v317 = vmul.f32 %v303, %v316
      %v318 = vadd.f32 %v317, 0.014752088
      %v319 = vmul.f32 %v303, %v318
      %v320 = vadd.f32 %v319, 0.112945676
      %v321 = vmul.f32 %v303, %v320
      %v322 = vadd.f32 %v321, 0.4994258
      %v323 = vmul.f32 %v303, %v322
      %v324 = vadd.f32 %v323, 1.0
      %v325 = vrcp.pop %v324
      %v326 = vmul.f32 %v324, %v325
      %v327 = vsub.f32 1.0, %v326
      %v328 = vmul.f32 %v325, %v327
      %v329 = vadd.f32 %v325, %v328
      %vm330 = vweird.f32 %v324
      %vm331 = vweird.f32 %v325
      %vm332 = vmor %vm330, %vm331
      %v333 = vsel %vm332, %v325, %v329
      %v334 = vand.u32 2147483647, %v324
      %vm335 = vcmp.eq.f32.partialorder %v334, 8.507059e+37
      %v336 = vand.u32 %v324, 2147483648
      %v337 = vor.u32 1.1754944e-38, %v336
      %v338 = vsel %vm335, %v337, %v333
      %v339 = vmul.f32 %v314, %v338
      %v340 = vmin.f32 %v339, 1.0
      %v341 = vmax.f32 %v340, -1.0
      %v342 = vadd.f32 %v341, 1.0
      %v343 = vmul.f32 %v300, %v342
      %v344 = vld [vmem:[%s3] sm:$0xff]
      %v345 = vld [vmem:[%s3 + $0x8] sm:$0xff]
      %v346 = vld [vmem:[%s3 + $0x10] sm:$0xff]
      %v347 = vld [vmem:[%s3 + $0x18] sm:$0xff]
      %v348 = vld [vmem:[%s3 + $0x20] sm:$0xff]
      %v349 = vld [vmem:[%s3 + $0x28] sm:$0xff]
      %v350 = vld [vmem:[%s3 + $0x30] sm:$0xff]
      %v351 = vld [vmem:[%s3 + $0x38] sm:$0xff]
      %v352 = vld [vmem:[%s3 + $0x40] sm:$0xff]
      %v353 = vld [vmem:[%s3 + $0x48] sm:$0xff]
      %v354 = vld [vmem:[%s3 + $0x50] sm:$0xff]
      %v355 = vld [vmem:[%s3 + $0x58] sm:$0xff]
      %v356 = vld [vmem:[%s3 + $0x60] sm:$0xff]
      %v357 = vld [vmem:[%s3 + $0x68] sm:$0xff]
      %v358 = vld [vmem:[%s3 + $0x70] sm:$0xff]
      %v359 = vld [vmem:[%s3 + $0x78] sm:$0xff]
      %v360 = vld [vmem:[%s4] sm:$0x1]
      %v362 = vperm.slane %v360, 0
      %364 = vmatpush.msra.mxu0 %v359
      %365 = vmatpush.msra.mxu0 %v358
      %366 = vmatpush.msra.mxu0 %v357
      %367 = vmatpush.msra.mxu0 %v356
      %368 = vmatpush.msra.mxu0 %v355
      %369 = vmatpush.msra.mxu0 %v354
      %370 = vmatpush.msra.mxu0 %v353
      %371 = vmatpush.msra.mxu0 %v352
      %372 = vmatpush.msra.mxu0 %v351
      %373 = vmatpush.msra.mxu0 %v350
      %374 = vmatpush.msra.mxu0 %v349
      %375 = vmatpush.msra.mxu0 %v348
      %376 = vmatpush.msra.mxu0 %v347
      %377 = vmatpush.msra.mxu0 %v346
      %378 = vmatpush.msra.mxu0 %v345
      %379 = vmatpush.msra.mxu0 %v344
      %380 = vmatmul.f32.gmra.mxu0 %v343
      %v381 = vpop.f32.mrf.mxu0
      %v382 = vadd.f32 %v362, %v381
      %383 = vdwg.mxu0
      %384 = vst [vmem:[%s257] sm:$0xff] %v382
      %p385 = scmp.lt.s32.totalorder %s18, 1
      %s386 = scalar_select %p385, %s18, 1
      %s387 = smul.addr %s386, 8
      %s388 = scalar_lea.vmem %s5, %s387
      %p389 = scmp.lt.s32.totalorder %s18, 1
      %s390 = scalar_select %p389, %s18, 1
      %s391 = smul.addr %s390, 8
      %s392 = scalar_lea.vmem %s6, %s391
      // Predicated region
      $region41: #{mlp_forward.1} parent=39 // pred_check
        %p393 = pneg %p146
      $region42: #{mlp_forward.1} parent=39 // pred_check_branch
        %395 = sbr.rel (%p393) target = $region44
      $region43: #{mlp_forward.1} parent=39 // pred_region
        _
      $region44: #{mlp_forward.1} parent=39 // pred_fallthru
        _
      // Predicated region
      $region45: #{mlp_forward.1} parent=39 // pred_check
        %p396 = pneg %p172
      $region46: #{mlp_forward.1} parent=39 // pred_check_branch
        %398 = sbr.rel (%p396) target = $region48
      $region47: #{mlp_forward.1} parent=39 // pred_region
        _
      $region48: #{mlp_forward.1} parent=39 // pred_fallthru
        _
    $region40: #{mlp_forward.1} parent=5 // pred_fallthru
      _
    %p399 = scmp.le.s32.totalorder 2, %s13
    // Predicated region
    $region49: #{mlp_forward.1} parent=5 // pred_check
      %p400 = pneg %p399
    $region50: #{mlp_forward.1} parent=5 // pred_check_branch
      %402 = sbr.rel (%p400) target = $region52
    $region51: #{mlp_forward.1} parent=5 // pred_region
      %s403 = ssub.s32 %s13, 2
      // Predicated region
      $region53: #{mlp_forward.1} parent=51 // pred_check
        %p404 = pneg %p152
      $region54: #{mlp_forward.1} parent=51 // pred_check_branch
        %406 = sbr.rel (%p404) target = $region56
      $region55: #{mlp_forward.1} parent=51 // pred_region
        %p407 = scmp.lt.s32.totalorder %s19, 1
        %s408 = scalar_select %p407, %s19, 1
        %s409 = smul.addr %s408, 8
        %s410 = scalar_lea.vmem %s5, %s409
      $region56: #{mlp_forward.1} parent=51 // pred_fallthru
        _
      // Predicated region
      $region57: #{mlp_forward.1} parent=51 // pred_check
        %p411 = pneg %p178
      $region58: #{mlp_forward.1} parent=51 // pred_check_branch
        %413 = sbr.rel (%p411) target = $region60
      $region59: #{mlp_forward.1} parent=51 // pred_region
        %p414 = scmp.lt.s32.totalorder %s19, 1
        %s415 = scalar_select %p414, %s19, 1
        %s416 = smul.addr %s415, 8
        %s417 = scalar_lea.vmem %s6, %s416
      $region60: #{mlp_forward.1} parent=51 // pred_fallthru
        _
    $region52: #{mlp_forward.1} parent=5 // pred_fallthru
      _
  $region6: #{mlp_forward.1} parent=0 // loop_footer
    %s17 = sadd.s32 1, %s13
  $region7: #{mlp_forward.1} parent=0 // loop_footer_branch
    %12 = sbr.rel target = $region3
  $region8: #{mlp_forward.1} parent=0 // loop_exit
    _

</llo_original>
